<compile_context>
chip_gen: v7x
topology: tpu7x:2x2x1
jax: 0.10.0
libtpu: 0.0.40
codegen_flags: <defaults>
</compile_context>

<pallas_src>
import math

import jax
import jax.numpy as jnp
from jax.experimental import pallas as pl
from jax.experimental.pallas import tpu as pltpu

_LANE = 128
_MAX_BATCH_BLOCK = 8  # max images blocked per grid step at small resolutions


def _fromrgb_kernel(x_ref, w_ref, b_ref, o_ref):
    # x_ref: (nb, Cin, t_hw)  w_ref: (Cout, Cin)  b_ref: (Cout, 1)
    # o_ref: (nb, Cout, t_hw)
    nb = x_ref.shape[0]
    w = w_ref[...]
    b = b_ref[...]
    for i in range(nb):  # nb is a small static block size (<= 8): unrolled
        y = jnp.dot(w, x_ref[i], preferred_element_type=jnp.float32)
        y = y + b
        # LeakyReLU(0.2); the sqrt(2) gain is pre-folded into w/b in the wrapper.
        y = jnp.where(y >= 0.0, y, 0.2 * y)
        o_ref[i] = y.astype(o_ref.dtype)


def _largest_divisor_leq(n, cap):
    for d in range(max(1, min(n, cap)), 0, -1):
        if n % d == 0:
            return d
    return 1


def _select_tiling(n, cin, cout, hw, itemsize, vmem_budget_bytes, max_tile_hw):
    """Pick (nb, t_hw): batch-block and lane-aligned spatial tile sizes."""
    # Double-buffered input + output bytes per spatial element.
    per_elem = 2 * itemsize * (cin + cout)
    t_budget = max(_LANE, min(max_tile_hw, vmem_budget_bytes // per_elem))
    t_budget -= t_budget % _LANE

    if hw > t_budget:
        # Large image: lane-aligned tile; boundary tile is masked by Pallas.
        t_hw, nb = t_budget, 1
    else:
        # Small image: full spatial extent (always a legal block); amortize
        # per-step overhead by blocking several batch images per step.
        t_hw = hw
        nb = _largest_divisor_leq(
            n, min(_MAX_BATCH_BLOCK, max(1, t_budget // max(hw, 1))))

    # v7x has 2 TensorCores: ensure >= 2 parallel programs when possible.
    if pl.cdiv(n, nb) * pl.cdiv(hw, t_hw) < 2:
        if n >= 2:
            nb = _largest_divisor_leq(n, max(1, n // 2))
        elif hw >= 2 * _LANE:
            t_hw = max(_LANE, ((hw // 2) // _LANE) * _LANE)
    return nb, t_hw


def from_rgb(x_nchw, weight, bias, *, out_dtype=None,
             vmem_budget_bytes=12 * 1024 * 1024, max_tile_hw=32768):
    """FromRGB forward.

    x_nchw: (N, Cin, H, W) float32/bf16
    weight: (Cout, Cin, 1, 1)  (un-scaled, as stored by EqualizedLRConv2d)
    bias:   (Cout,)
    returns (N, Cout, H, W) in `out_dtype` (default: x dtype)
    """
    n, cin, h, w = x_nchw.shape
    cout = weight.shape[0]
    hw = h * w
    out_dtype = x_nchw.dtype if out_dtype is None else out_dtype

    # Fold equalized-LR runtime scale 1/sqrt(fan_in) and the leaky-relu gain
    # sqrt(2) into the (tiny) weight / bias. Valid because the gain is > 0.
    gain = math.sqrt(2.0)
    w_scale = gain / math.sqrt(cin * 1 * 1)
    w_mat = (weight.reshape(cout, cin) * w_scale).astype(x_nchw.dtype)  # (Cout, Cin)
    b_col = (bias.reshape(cout, 1) * gain).astype(jnp.float32)          # (Cout, 1)

    # Pure reshape (no transpose, no copy): NCHW is kept native.
    x_flat = x_nchw.reshape(n, cin, hw)

    nb, t_hw = _select_tiling(n, cin, cout, hw, x_nchw.dtype.itemsize,
                              vmem_budget_bytes, max_tile_hw)
    grid = (pl.cdiv(n, nb), pl.cdiv(hw, t_hw))

    out_flat = pl.pallas_call(
        _fromrgb_kernel,
        out_shape=jax.ShapeDtypeStruct((n, cout, hw), out_dtype),
        grid_spec=pltpu.PrefetchScalarGridSpec(
            num_scalar_prefetch=0,
            grid=grid,
            in_specs=[
                pl.BlockSpec((nb, cin, t_hw), lambda b, s: (b, 0, s)),
                pl.BlockSpec((cout, cin), lambda b, s: (0, 0)),
                pl.BlockSpec((cout, 1), lambda b, s: (0, 0)),
            ],
            out_specs=pl.BlockSpec((nb, cout, t_hw), lambda b, s: (b, 0, s)),
        ),
        compiler_params=pltpu.CompilerParams(
            dimension_semantics=("parallel", "parallel"),
            vmem_limit_bytes=32 * 1024 * 1024),
    )(x_flat, w_mat, b_col)

    # Free reshape back to NCHW.
    return out_flat.reshape(n, cout, h, w)


def from_rgb_reference(x_nchw, weight, bias):
    """Plain-JAX reference (mirrors the PyTorch forward)."""
    cin = x_nchw.shape[1]
    scale = 1.0 / math.sqrt(cin)
    w_scaled = weight * scale  # (Cout, Cin, 1, 1)
    y = jax.lax.conv_general_dilated(
        x_nchw, w_scaled, window_strides=(1, 1), padding="VALID",
        dimension_numbers=("NCHW", "OIHW", "NCHW"))
    y = y + bias.reshape(1, -1, 1, 1)
    y = jnp.where(y >= 0.0, y, 0.2 * y) * math.sqrt(2.0)
    return y


def _check(x, weight, bias):
    out = from_rgb(x, weight, bias)
    jax.block_until_ready(out)
    ref = from_rgb_reference(x, weight, bias)
    assert out.shape == ref.shape, (out.shape, ref.shape)
    err = float(jnp.max(jnp.abs(out - ref)))
    assert jnp.allclose(out, ref, atol=1e-4, rtol=1e-4), err


if __name__ == "__main__":
    key = jax.random.PRNGKey(0)
    k_w, k_b, k1, k2, k3 = jax.random.split(key, 5)

    N, Cin, Cout = 2, 3, 32  # RGB in, 32 feature maps out

    weight = jax.random.normal(k_w, (Cout, Cin, 1, 1), dtype=jnp.float32)
    bias = 0.1 * jax.random.normal(k_b, (Cout,), dtype=jnp.float32)

    # Case 1: small spatial (16x16) — full-extent spatial block, batch split
    #         across grid programs.
    _check(jax.random.normal(k1, (N, Cin, 16, 16), dtype=jnp.float32), weight, bias)

    # Case 2: spatial not a multiple of 128 (20x20) — full-extent (unaligned)
    #         spatial block still legal.
    _check(jax.random.normal(k2, (N, Cin, 20, 20), dtype=jnp.float32), weight, bias)

    # Case 3: large spatial (192x192, hw=36864 > 32768) — multi-tile spatial
    #         grid with a masked (partial) boundary tile.
    _check(jax.random.normal(k3, (N, Cin, 192, 192), dtype=jnp.float32), weight, bias)

    print("KERNEL_OK")
</pallas_src>

<mosaic_0001>
module attributes {stable_mosaic.version = 11 : i64} {
  func.func @_fromrgb_kernel(%arg0: i32, %arg1: i32, %arg2: memref<1x3x256xf32, #tpu.memory_space<vmem>>, %arg3: memref<32x3xf32, #tpu.memory_space<vmem>>, %arg4: memref<32x1xf32, #tpu.memory_space<vmem>>, %arg5: memref<1x32x256xf32, #tpu.memory_space<vmem>>) attributes {dimension_semantics = [#tpu.dimension_semantics<parallel>, #tpu.dimension_semantics<parallel>], iteration_bounds = array<i64: 2, 1>, scalar_prefetch = 0 : i64, scratch_operands = 0 : i64, tpu.core_type = #tpu.core_type<tc>, window_params = [{transform_indices = @transform_0, window_bounds = array<i64: 1, 3, 256>}, {pipeline_mode = #tpu.pipeline_mode<synchronous>, transform_indices = @transform_1, window_bounds = array<i64: 32, 3>}, {pipeline_mode = #tpu.pipeline_mode<synchronous>, transform_indices = @transform_2, window_bounds = array<i64: 32, 1>}, {transform_indices = @transform_3, window_bounds = array<i64: 1, 32, 256>}]} {
    %c0 = arith.constant 0 : index
    %c0_0 = arith.constant 0 : index
    %0 = vector.load %arg3[%c0, %c0_0] : memref<32x3xf32, #tpu.memory_space<vmem>>, vector<32x3xf32>
    %c0_1 = arith.constant 0 : index
    %c0_2 = arith.constant 0 : index
    %1 = vector.load %arg4[%c0_1, %c0_2] : memref<32x1xf32, #tpu.memory_space<vmem>>, vector<32x1xf32>
    %c0_3 = arith.constant 0 : index
    %c0_4 = arith.constant 0 : index
    %c0_5 = arith.constant 0 : index
    %2 = vector.load %arg2[%c0_3, %c0_4, %c0_5] : memref<1x3x256xf32, #tpu.memory_space<vmem>>, vector<1x3x256xf32>
    %3 = vector.shape_cast %2 : vector<1x3x256xf32> to vector<3x256xf32>
    %cst = arith.constant dense<0.000000e+00> : vector<32x256xf32>
    %4 = tpu.matmul %0, %3, %cst {dimension_numbers = #tpu.dot_dimension_numbers<[1], [0], [0], [1], [0, 0, 1, 1], [], []>} : vector<32x3xf32>, vector<3x256xf32>, vector<32x256xf32> -> vector<32x256xf32>
    %5 = vector.broadcast %1 : vector<32x1xf32> to vector<32x256xf32>
    %6 = arith.addf %4, %5 : vector<32x256xf32>
    %cst_6 = arith.constant 0.000000e+00 : f32
    %7 = vector.broadcast %cst_6 : f32 to vector<32x256xf32>
    %8 = arith.cmpf oge, %6, %7 : vector<32x256xf32>
    %cst_7 = arith.constant 2.000000e-01 : f32
    %9 = vector.broadcast %cst_7 : f32 to vector<32x256xf32>
    %10 = arith.mulf %9, %6 : vector<32x256xf32>
    %11 = arith.select %8, %6, %10 : vector<32x256xi1>, vector<32x256xf32>
    %c0_8 = arith.constant 0 : index
    %c0_9 = arith.constant 0 : index
    %c0_10 = arith.constant 0 : index
    %12 = vector.load %arg5[%c0_8, %c0_9, %c0_10] : memref<1x32x256xf32, #tpu.memory_space<vmem>>, vector<1x32x256xf32>
    %13 = vector.shape_cast %12 : vector<1x32x256xf32> to vector<32x256xf32>
    %14 = vector.shape_cast %11 : vector<32x256xf32> to vector<1x32x256xf32>
    tpu.vector_store %arg5[%c0_8, %c0_9, %c0_10], %14 {strides = array<i32>} : memref<1x32x256xf32, #tpu.memory_space<vmem>>, vector<1x32x256xf32>,
    return
  }
  func.func @transform_0(%arg0: i32, %arg1: i32) -> (i32, i32, i32) {
    %c0_i32 = arith.constant 0 : i32
    %c0_i32_0 = arith.constant 0 : i32
    return %arg0, %c0_i32, %arg1 : i32, i32, i32
  }
  func.func @transform_1(%arg0: i32, %arg1: i32) -> (i32, i32) {
    %c0_i32 = arith.constant 0 : i32
    %c0_i32_0 = arith.constant 0 : i32
    %c0_i32_1 = arith.constant 0 : i32
    return %c0_i32, %c0_i32_0 : i32, i32
  }
  func.func @transform_2(%arg0: i32, %arg1: i32) -> (i32, i32) {
    %c0_i32 = arith.constant 0 : i32
    %c0_i32_0 = arith.constant 0 : i32
    %c0_i32_1 = arith.constant 0 : i32
    return %c0_i32, %c0_i32_0 : i32, i32
  }
  func.func @transform_3(%arg0: i32, %arg1: i32) -> (i32, i32, i32) {
    %c0_i32 = arith.constant 0 : i32
    %c0_i32_0 = arith.constant 0 : i32
    return %arg0, %c0_i32, %arg1 : i32, i32, i32
  }
}

</mosaic_0001>

<llo_original>
// kernel: tpu_custom_call.1
$region0: #{tpu_custom_call.1}
  #allocation0 [shape = 'u32[]', space=smem, size = 0x4, offset = 0x4, fixed_abs, tag = 'smem constant byte address 0x4 - core index']
  #allocation1 [shape = 'u32[144,128]{1,0:T(1,128)}', space=vmem, size = 0x12000, scoped, tag = 'internal scratch']
  %s0 = inlined_call_operand.vmem [shape: f32[2,3,256], index: 0, kind: input, shape index: {}]
  %s1 = inlined_call_operand.vmem [shape: f32[32,3], index: 1, kind: input, shape index: {}]
  %s2 = inlined_call_operand.vmem [shape: f32[32,1], index: 2, kind: input, shape index: {}]
  %s3 = inlined_call_operand.hbm [shape: f32[2,32,256], index: 3, kind: output, shape index: {}]
  %s4 = sld [smem:[#allocation0]]
  $region45: #{tpu_custom_call.1} parent=0
    _
  %s6 = ssub.s32 1, %s4
  %s7 = scalar_select 0, %s6, %s4
  $region1: #{tpu_custom_call.1} parent=0
    #allocation2 [shape = 'u8[65536]{0}', space=vmem, size = 0x10000, scoped, tag = 'output window, operand 0']
    #allocation3 [shape = 's32[2]{0}', space=sflag, size = 0x8, scoped, tag = 'scoped memory for tpu_custom_call.1']
    %8 = vsyncpa [#allocation3], 0
    %s9 = scalar_lea.sflag [#allocation3], 1
    %10 = vsyncpa %s9, 0
    loop: start=0, step=1, limit=4
    $region2: #{tpu_custom_call.1} parent=1 // loop_pre_header
      _
    $region3: #{tpu_custom_call.1} parent=1 // loop_header
      %s12 = sphi 0, %s16
      %p13 = scmp.ge.s32.totalorder %s12, 4
      %s19 = sphi 0, %s31
      %s20 = sphi 0, %s27
      %s21 = sphi 0, %s19
      %s22 = sphi 0, %s20
      %s23 = sphi 0, %s21
      %s24 = sphi 0, %s22
      %s36 = sphi 0, %s38
      %s39 = sphi 0, %s36
      %s40 = sphi 0, %s39
      %s56 = sphi 0, %s40
      %s60 = sphi 0, %s60
      %s62 = sphi 0, %s60
      %s63 = sphi 0, %s62
      %s77 = sphi 0, %s63
      %s81 = sphi 0, %s81
      %s83 = sphi 0, %s81
      %s84 = sphi 0, %s83
      %s98 = sphi 0, %s84
      %s106 = sphi 0, %s108
      %s109 = sphi 0, %s106
      %s110 = sphi 0, %s109
      %s126 = sphi 0, %s110
    $region4: #{tpu_custom_call.1} parent=1 // loop_header_branch
      %15 = sbr.rel (%p13) target = $region8
    $region5: #{tpu_custom_call.1} parent=1 // loop_body
      %s17 = ssub.s32 %s12, 1
      %s18 = ssub.s32 %s12, 2
      %s25 = sadd.s32 1, %s20
      %p26 = scmp.ge.s32.totalorder %s25, 1
      %s27 = scalar_select %p26, 0, %s25
      %s28 = sadd.s32 1, %s19
      %s29 = scalar_select %p26, %s28, %s19
      %p30 = scmp.ge.s32.totalorder %s29, 2
      %s31 = scalar_select %p30, 0, %s29
      %s32 = ssub.s32 %s19, %s31
      %s33 = ssub.s32 %s20, %s27
      %s34 = sor.u32 %s32, %s33
      %p35 = scmp.eq.s32.totalorder %s34, 0
      %s37 = sadd.s32 %s36, 1
      %s38 = scalar_select %p35, %s36, %s37
      %p41 = pneg %p35
      %p42 = scmp.eq.s32.totalorder %s12, 1
      %p43 = por %p41, %p42
      %p44 = scmp.ne.s32.totalorder %s36, %s39
      %p45 = scmp.eq.s32.totalorder %s12, 0
      %p46 = por %p44, %p45
      %p47 = scmp.ne.s32.totalorder %s36, %s39
      %p48 = scmp.eq.s32.totalorder %s17, 1
      %p49 = por %p47, %p48
      %p50 = scmp.ne.s32.totalorder %s39, %s40
      %p51 = scmp.eq.s32.totalorder %s17, 0
      %p52 = por %p50, %p51
      %p53 = scmp.ne.s32.totalorder %s39, %s40
      %p54 = scmp.eq.s32.totalorder %s18, 1
      %p55 = por %p53, %p54
      %p57 = scmp.ne.s32.totalorder %s40, %s56
      %p58 = scmp.eq.s32.totalorder %s18, 0
      %p59 = por %p57, %p58
      %s61 = sadd.s32 %s60, 1
      %p64 = scmp.eq.s32.totalorder %s12, 1
      %p65 = scmp.ne.s32.totalorder %s60, %s62
      %p66 = scmp.eq.s32.totalorder %s12, 0
      %p67 = por %p65, %p66
      %p68 = scmp.ne.s32.totalorder %s60, %s62
      %p69 = scmp.eq.s32.totalorder %s17, 1
      %p70 = por %p68, %p69
      %p71 = scmp.ne.s32.totalorder %s62, %s63
      %p72 = scmp.eq.s32.totalorder %s17, 0
      %p73 = por %p71, %p72
      %p74 = scmp.ne.s32.totalorder %s62, %s63
      %p75 = scmp.eq.s32.totalorder %s18, 1
      %p76 = por %p74, %p75
      %p78 = scmp.ne.s32.totalorder %s63, %s77
      %p79 = scmp.eq.s32.totalorder %s18, 0
      %p80 = por %p78, %p79
      %s82 = sadd.s32 %s81, 1
      %p85 = scmp.eq.s32.totalorder %s12, 1
      %p86 = scmp.ne.s32.totalorder %s81, %s83
      %p87 = scmp.eq.s32.totalorder %s12, 0
      %p88 = por %p86, %p87
      %p89 = scmp.ne.s32.totalorder %s81, %s83
      %p90 = scmp.eq.s32.totalorder %s17, 1
      %p91 = por %p89, %p90
      %p92 = scmp.ne.s32.totalorder %s83, %s84
      %p93 = scmp.eq.s32.totalorder %s17, 0
      %p94 = por %p92, %p93
      %p95 = scmp.ne.s32.totalorder %s83, %s84
      %p96 = scmp.eq.s32.totalorder %s18, 1
      %p97 = por %p95, %p96
      %p99 = scmp.ne.s32.totalorder %s84, %s98
      %p100 = scmp.eq.s32.totalorder %s18, 0
      %p101 = por %p99, %p100
      %s102 = ssub.s32 %s19, %s31
      %s103 = ssub.s32 %s20, %s27
      %s104 = sor.u32 %s102, %s103
      %p105 = scmp.eq.s32.totalorder %s104, 0
      %s107 = sadd.s32 %s106, 1
      %s108 = scalar_select %p105, %s106, %s107
      %p111 = pneg %p105
      %p112 = scmp.eq.s32.totalorder %s12, 1
      %p113 = por %p111, %p112
      %p114 = scmp.ne.s32.totalorder %s106, %s109
      %p115 = scmp.eq.s32.totalorder %s12, 0
      %p116 = por %p114, %p115
      %p117 = scmp.ne.s32.totalorder %s106, %s109
      %p118 = scmp.eq.s32.totalorder %s17, 1
      %p119 = por %p117, %p118
      %p120 = scmp.ne.s32.totalorder %s109, %s110
      %p121 = scmp.eq.s32.totalorder %s17, 0
      %p122 = por %p120, %p121
      %p123 = scmp.ne.s32.totalorder %s109, %s110
      %p124 = scmp.eq.s32.totalorder %s18, 1
      %p125 = por %p123, %p124
      %p127 = scmp.ne.s32.totalorder %s110, %s126
      %p128 = scmp.eq.s32.totalorder %s18, 0
      %p129 = por %p127, %p128
      %p130 = scmp.le.s32.totalorder 1, %s12
      %p131 = scmp.lt.s32.totalorder %s12, 3
      %p132 = pnand %p130, %p131
      %p133 = pneg %p132
      // Predicated region
      $region9: #{tpu_custom_call.1} parent=5 // pred_check
        _
      $region10: #{tpu_custom_call.1} parent=5 // pred_check_branch
        %135 = sbr.rel (%p132) target = $region12
      $region11: #{tpu_custom_call.1} parent=5 // pred_region
        %s136 = ssub.s32 %s12, 1
        // Predicated region
        $region13: #{tpu_custom_call.1} parent=11 // pred_check
          %p137 = pneg %p73
        $region14: #{tpu_custom_call.1} parent=11 // pred_check_branch
          %139 = sbr.rel (%p137) target = $region16
        $region15: #{tpu_custom_call.1} parent=11 // pred_region
          _
        $region16: #{tpu_custom_call.1} parent=11 // pred_fallthru
          _
        // Predicated region
        $region17: #{tpu_custom_call.1} parent=11 // pred_check
          %p140 = pneg %p94
        $region18: #{tpu_custom_call.1} parent=11 // pred_check_branch
          %142 = sbr.rel (%p140) target = $region20
        $region19: #{tpu_custom_call.1} parent=11 // pred_region
          _
        $region20: #{tpu_custom_call.1} parent=11 // pred_fallthru
          _
      $region12: #{tpu_custom_call.1} parent=5 // pred_fallthru
        _
      %p143 = scmp.lt.s32.totalorder %s12, 2
      // Predicated region
      $region21: #{tpu_custom_call.1} parent=5 // pred_check
        %p144 = pneg %p143
      $region22: #{tpu_custom_call.1} parent=5 // pred_check_branch
        %146 = sbr.rel (%p144) target = $region24
      $region23: #{tpu_custom_call.1} parent=5 // pred_region
        // Predicated region
        $region25: #{tpu_custom_call.1} parent=23 // pred_check
          %p147 = pneg %p46
        $region26: #{tpu_custom_call.1} parent=23 // pred_check_branch
          %149 = sbr.rel (%p147) target = $region28
        $region27: #{tpu_custom_call.1} parent=23 // pred_region
          %s150 = smul.u32 2, %s20
          %p151 = scmp.lt.s32.totalorder %s19, 1
          %s152 = scalar_select %p151, %s19, 1
          %p153 = scmp.lt.s32.totalorder %s150, 1
          %s154 = scalar_select %p153, %s150, 1
          %s155 = smul.addr %s152, 2
          %s156 = sadd.s32 %s154, %s155
          %s157 = smul.addr %s156, 4
          %s158 = scalar_lea.vmem %s0, %s157
          %s159 = smul.u32 2, %s20
        $region28: #{tpu_custom_call.1} parent=23 // pred_fallthru
          _
      $region24: #{tpu_custom_call.1} parent=5 // pred_fallthru
        _
      %p160 = scmp.le.s32.totalorder 1, %s12
      %p161 = scmp.lt.s32.totalorder %s12, 3
      %p162 = pnand %p160, %p161
      %p163 = pneg %p162
      // Predicated region
      $region29: #{tpu_custom_call.1} parent=5 // pred_check
        _
      $region30: #{tpu_custom_call.1} parent=5 // pred_check_branch
        %165 = sbr.rel (%p162) target = $region32
      $region31: #{tpu_custom_call.1} parent=5 // pred_region
        %s166 = ssub.s32 %s12, 1
        %s167 = smul.u32 2, %s22
        %p168 = scmp.lt.s32.totalorder %s21, 1
        %s169 = scalar_select %p168, %s21, 1
        %p170 = scmp.lt.s32.totalorder %s167, 1
        %s171 = scalar_select %p170, %s167, 1
        %s172 = smul.addr %s169, 2
        %s173 = sadd.s32 %s171, %s172
        %s174 = smul.addr %s173, 4
        %s175 = scalar_lea.vmem %s0, %s174
        %p176 = pneg %p52
        %p177 = pneg %p49
        %p178 = pneg %p73
        %p179 = pneg %p70
        %p180 = pneg %p94
        %p181 = pneg %p91
        %p182 = pneg %p122
        %p183 = pneg %p119
        %s184 = sand.u32 %s109, 1
        %s185 = scalar_lea.sflag [#allocation3], %s184
        %s186 = sand.u32 %s109, 1
        %s187 = smul.addr %s186, 64
        %s188 = scalar_lea.vmem [#allocation2], %s187
        %s189 = smul.u32 2, %s22
        %p190 = scmp.lt.s32.totalorder %s21, 1
        %s191 = scalar_select %p190, %s21, 1
        %p192 = scmp.lt.s32.totalorder %s189, 1
        %s193 = scalar_select %p192, %s189, 1
        %s194 = smul.addr %s191, 2
        %s195 = sadd.s32 %s193, %s194
        %s196 = smul.addr %s195, 4
        %s197 = scalar_lea.vmem %s0, %s196
        %s198 = smul.u32 2, %s22
        %s199 = smul.u32 2, %s22
        %v200 = vld [vmem:[%s1] sm:$0xff]
        %v201 = vld [vmem:[%s1 + $0x8] sm:$0xff]
        %v202 = vld [vmem:[%s1 + $0x10] sm:$0xff]
        %v203 = vld [vmem:[%s1 + $0x18] sm:$0xff]
        %v204 = vld [vmem:[%s2] sm:$0xff]
        %v205 = vld [vmem:[%s2 + $0x8] sm:$0xff]
        %v206 = vld [vmem:[%s2 + $0x10] sm:$0xff]
        %v207 = vld [vmem:[%s2 + $0x18] sm:$0xff]
        %v208 = vld [vmem:[%s197] sm:$0x77]
        %210 = vset.pattern.permute.xlu0 0
        %211 = vperm.xlu0 %210, %v204
        %v212 = vpop.permute.xlu0 %211
        %215 = vset.pattern.permute.xlu0 0
        %216 = vperm.xlu0 %215, %v205
        %v217 = vpop.permute.xlu0 %216
        %220 = vset.pattern.permute.xlu0 0
        %221 = vperm.xlu0 %220, %v206
        %v222 = vpop.permute.xlu0 %221
        %225 = vset.pattern.permute.xlu0 0
        %226 = vperm.xlu0 %225, %v207
        %v227 = vpop.permute.xlu0 %226
        %v230 = vcombine.high %v208, %v208
        %vm231 = vcmask 23552
        %v233 = vsel %vm231, %v200, 0
        %v236 = vsel %vm231, %v201, 0
        %v239 = vsel %vm231, %v202, 0
        %v242 = vsel %vm231, %v203, 0
        %vm244 = vcmask 1042432
        %v245 = vsel %vm244, %v208, 0
        %v247 = vsel %vm244, %v230, 0
        %249 = vmatprep.subr.mxu0 %v247
        %250 = vmatpush1.msra.mxu0 %v245
        %251 = vmatprep.subr.mxu0 0.0
        %252 = vmatpush1.msra.mxu0 0.0
        %253 = vmatprep.subr.mxu0 0.0
        %254 = vmatpush1.msra.mxu0 0.0
        %255 = vmatprep.subr.mxu0 0.0
        %256 = vmatpush1.msra.mxu0 0.0
        %257 = vmatprep.subr.mxu0 0.0
        %258 = vmatpush1.msra.mxu0 0.0
        %259 = vmatprep.subr.mxu0 0.0
        %260 = vmatpush1.msra.mxu0 0.0
        %261 = vmatprep.subr.mxu0 0.0
        %262 = vmatpush1.msra.mxu0 0.0
        %263 = vmatprep.subr.mxu0 0.0
        %264 = vmatpush1.msra.mxu0 0.0
        %265 = vmatprep.subr.mxu0 0.0
        %266 = vmatpush1.msra.mxu0 0.0
        %267 = vmatprep.subr.mxu0 0.0
        %268 = vmatpush1.msra.mxu0 0.0
        %269 = vmatprep.subr.mxu0 0.0
        %270 = vmatpush1.msra.mxu0 0.0
        %271 = vmatprep.subr.mxu0 0.0
        %272 = vmatpush1.msra.mxu0 0.0
        %273 = vmatprep.subr.mxu0 0.0
        %274 = vmatpush1.msra.mxu0 0.0
        %275 = vmatprep.subr.mxu0 0.0
        %276 = vmatpush1.msra.mxu0 0.0
        %277 = vmatprep.subr.mxu0 0.0
        %278 = vmatpush1.msra.mxu0 0.0
        %279 = vmatprep.subr.mxu0 0.0
        %280 = vmatpush1.msra.mxu0 0.0
        %281 = vmatprep.subr.mxu0 0.0
        %282 = vmatpush1.msra.mxu0 0.0
        %283 = vmatprep.subr.mxu0 0.0
        %284 = vmatpush1.msra.mxu0 0.0
        %285 = vmatprep.subr.mxu0 0.0
        %286 = vmatpush1.msra.mxu0 0.0
        %287 = vmatprep.subr.mxu0 0.0
        %288 = vmatpush1.msra.mxu0 0.0
        %289 = vmatprep.subr.mxu0 0.0
        %290 = vmatpush1.msra.mxu0 0.0
        %291 = vmatprep.subr.mxu0 0.0
        %292 = vmatpush1.msra.mxu0 0.0
        %293 = vmatprep.subr.mxu0 0.0
        %294 = vmatpush1.msra.mxu0 0.0
        %295 = vmatprep.subr.mxu0 0.0
        %296 = vmatpush1.msra.mxu0 0.0
        %297 = vmatprep.subr.mxu0 0.0
        %298 = vmatpush1.msra.mxu0 0.0
        %299 = vmatprep.subr.mxu0 0.0
        %300 = vmatpush1.msra.mxu0 0.0
        %301 = vmatprep.subr.mxu0 0.0
        %302 = vmatpush1.msra.mxu0 0.0
        %303 = vmatprep.subr.mxu0 0.0
        %304 = vmatpush1.msra.mxu0 0.0
        %305 = vmatprep.subr.mxu0 0.0
        %306 = vmatpush1.msra.mxu0 0.0
        %307 = vmatprep.subr.mxu0 0.0
        %308 = vmatpush1.msra.mxu0 0.0
        %309 = vmatprep.subr.mxu0 0.0
        %310 = vmatpush1.msra.mxu0 0.0
        %311 = vmatprep.subr.mxu0 0.0
        %312 = vmatpush1.msra.mxu0 0.0
        %313 = vmatprep.mubr.f32.mxu0 0.0
        %314 = vmatmul.mubr.f32.gmra.mrb[0].mxu0 %v233
        %v315 = vpop.f32.mrb[0].mxu0
        %v316 = vadd.f32 %v212, %v315
        %v317 = vpop.f32.mrb[0].mxu0
        %v318 = vadd.f32 %v212, %v317
        %319 = vmatprep.mubr.f32.mxu0 0.0
        %320 = vmatmul.mubr.f32.gmra.mrb[0].mxu0 %v236
        %v321 = vpop.f32.mrb[0].mxu0
        %v322 = vadd.f32 %v217, %v321
        %v323 = vpop.f32.mrb[0].mxu0
        %v324 = vadd.f32 %v217, %v323
        %325 = vmatprep.mubr.f32.mxu0 0.0
        %326 = vmatmul.mubr.f32.gmra.mrb[0].mxu0 %v239
        %v327 = vpop.f32.mrb[0].mxu0
        %v328 = vadd.f32 %v222, %v327
        %v329 = vpop.f32.mrb[0].mxu0
        %v330 = vadd.f32 %v222, %v329
        %331 = vmatprep.mubr.f32.mxu0 0.0
        %332 = vmatmul.mubr.f32.gmra.mrb[0].mxu0 %v242
        %v333 = vpop.f32.mrb[0].mxu0
        %v334 = vadd.f32 %v227, %v333
        %v335 = vpop.f32.mrb[0].mxu0
        %v336 = vadd.f32 %v227, %v335
        %337 = vdwg.mxu0
        %vm338 = vcmp.ge.f32.partialorder %v316, 0.0
        %vm339 = vcmp.ge.f32.partialorder %v318, 0.0
        %vm340 = vcmp.ge.f32.partialorder %v322, 0.0
        %vm341 = vcmp.ge.f32.partialorder %v324, 0.0
        %vm342 = vcmp.ge.f32.partialorder %v328, 0.0
        %vm343 = vcmp.ge.f32.partialorder %v330, 0.0
        %vm344 = vcmp.ge.f32.partialorder %v334, 0.0
        %vm345 = vcmp.ge.f32.partialorder %v336, 0.0
        %v346 = vmul.f32 %v316, 0.2
        %v347 = vmul.f32 %v318, 0.2
        %v348 = vmul.f32 %v322, 0.2
        %v349 = vmul.f32 %v324, 0.2
        %v350 = vmul.f32 %v328, 0.2
        %v351 = vmul.f32 %v330, 0.2
        %v352 = vmul.f32 %v334, 0.2
        %v353 = vmul.f32 %v336, 0.2
        %v354 = vsel %vm338, %v316, %v346
        %v355 = vsel %vm339, %v318, %v347
        %v356 = vsel %vm340, %v322, %v348
        %v357 = vsel %vm341, %v324, %v349
        %v358 = vsel %vm342, %v328, %v350
        %v359 = vsel %vm343, %v330, %v351
        %v360 = vsel %vm344, %v334, %v352
        %v361 = vsel %vm345, %v336, %v353
        %362 = vst [vmem:[%s188] sm:$0xff] %v354
        %363 = vst [vmem:[%s188 + $0x8] sm:$0xff] %v355
        %364 = vst [vmem:[%s188 + $0x10] sm:$0xff] %v356
        %365 = vst [vmem:[%s188 + $0x18] sm:$0xff] %v357
        %366 = vst [vmem:[%s188 + $0x20] sm:$0xff] %v358
        %367 = vst [vmem:[%s188 + $0x28] sm:$0xff] %v359
        %368 = vst [vmem:[%s188 + $0x30] sm:$0xff] %v360
        %369 = vst [vmem:[%s188 + $0x38] sm:$0xff] %v361
        %s370 = sand.u32 %s109, 1
        %s371 = scalar_lea.sflag [#allocation3], %s370
        %s372 = sand.u32 %s109, 1
        %s373 = smul.addr %s372, 64
        %s374 = scalar_lea.vmem [#allocation2], %s373
        // Predicated region
        $region33: #{tpu_custom_call.1} parent=31 // pred_check
          %p375 = pneg %p119
        $region34: #{tpu_custom_call.1} parent=31 // pred_check_branch
          %377 = sbr.rel (%p375) target = $region36
        $region35: #{tpu_custom_call.1} parent=31 // pred_region
          %s378 = smul.u32 2, %s22
          %s380 = ssub.s32 1024, 1024
          %381 = vsyncadd %s371, %s380
          %s382 = smul.addr %s21, 8
          %s383 = sadd.s32 %s378, %s382
          %s384 = smul.addr %s383, 128
          %s385 = scalar_lea.hbm %s3, %s384
          %s386 = sshll.u32 %s374, 4
          %s387 = int_to_ptr.vmem [resolvable:$true] %s386
          %392 = dma.vmem_to_hbm [thread:$0]  %s387, 1024, %s385, %s371, 256, 256, 16
        $region36: #{tpu_custom_call.1} parent=31 // pred_fallthru
          _
      $region32: #{tpu_custom_call.1} parent=5 // pred_fallthru
        _
      %p393 = scmp.le.s32.totalorder 2, %s12
      // Predicated region
      $region37: #{tpu_custom_call.1} parent=5 // pred_check
        %p394 = pneg %p393
      $region38: #{tpu_custom_call.1} parent=5 // pred_check_branch
        %396 = sbr.rel (%p394) target = $region40
      $region39: #{tpu_custom_call.1} parent=5 // pred_region
        %s397 = ssub.s32 %s12, 2
        // Predicated region
        $region41: #{tpu_custom_call.1} parent=39 // pred_check
          %p398 = pneg %p125
        $region42: #{tpu_custom_call.1} parent=39 // pred_check_branch
          %400 = sbr.rel (%p398) target = $region44
        $region43: #{tpu_custom_call.1} parent=39 // pred_region
          %s401 = sand.u32 %s110, 1
          %s402 = scalar_lea.sflag [#allocation3], %s401
          %s403 = sand.u32 %s110, 1
          %s404 = smul.addr %s403, 64
          %s405 = scalar_lea.vmem [#allocation2], %s404
          %406 = dma.done %s402, 1024
        $region44: #{tpu_custom_call.1} parent=39 // pred_fallthru
          _
      $region40: #{tpu_custom_call.1} parent=5 // pred_fallthru
        _
    $region6: #{tpu_custom_call.1} parent=1 // loop_footer
      %s16 = sadd.s32 1, %s12
    $region7: #{tpu_custom_call.1} parent=1 // loop_footer_branch
      %11 = sbr.rel target = $region3
    $region8: #{tpu_custom_call.1} parent=1 // loop_exit
      _
    %407 = vsyncpa [#allocation3], 1
    %s408 = scalar_lea.sflag [#allocation3], 1
    %409 = vsyncpa %s408, 1

</llo_original>
